<compile_context>
chip_gen: v5e
topology: v5e:2x2
jax: 0.10.0
libtpu: 0.0.40
codegen_flags: <defaults>
</compile_context>

<pallas_src>
import functools

import jax
import jax.numpy as jnp
from jax.experimental import pallas as pl
from jax.experimental.pallas import tpu as pltpu


# ----------------------------- Pallas kernel ------------------------------- #
def cgr_kernel(x_ref, w_ref, bias_ref, gamma_ref, beta_ref, gmat_ref,
               out_ref, xcol_ref, *, k, dilation, wp, wo, pout, hw_valid, eps):
    # x_ref   : (1, Cin_pad, FLAT)       zero-padded activation, flattened, bf16
    # w_ref   : (Cout, k*k*Cin_pad)      weights, column = (i*k+j)*Cin_pad + c, bf16
    # bias/gamma/beta: (Cout, 1)         f32
    # gmat_ref: (Cout, Cout)             group-averaging matrix (/ cpg*HWvalid)
    # out_ref : (1, Cout, POUT)          POUT = Ho*Wp (pad cols cropped in wrapper)
    # xcol_ref: (k*k*Cin_pad, POUT)      bf16 VMEM scratch of stacked windows
    cin_p = x_ref.shape[1]
    cout = w_ref.shape[0]

    # --- stack the k*k shifted windows once (aligned 8-row blocks) ----------
    for t in range(k * k):
        i, j = divmod(t, k)
        s = (i * wp + j) * dilation                 # static lane offset of tap t
        xcol_ref[t * cin_p:(t + 1) * cin_p, :] = x_ref[0, :, s:s + pout]

    # --- convolution: single MXU matmul, K = k*k*Cin_pad, f32 accumulation --
    conv = jnp.dot(w_ref[...], xcol_ref[...],
                   preferred_element_type=jnp.float32)        # (Cout, POUT) f32

    # --- validity mask of the Wp-wide row grid (built in-kernel, no input) --
    col = jax.lax.broadcasted_iota(jnp.int32, (1, pout), 1) % wp
    valid = col < wo                                          # (1, POUT) bool

    # --- GroupNorm statistics: one masked pass, exact f32 reduction ---------
    stacked = jnp.concatenate([conv, conv * conv], axis=0)    # (2*Cout, POUT)
    stacked = jnp.where(valid, stacked, 0.0)
    sums = jnp.sum(stacked, axis=-1, keepdims=True)           # (2*Cout, 1)
    csum = sums[:cout]                                        # sum(conv)
    csq = sums[cout:]                                         # sum(conv^2)

    # Conv bias folded analytically into the statistics.
    bias = bias_ref[...]
    zsum = csum + hw_valid * bias
    zsq = csq + 2.0 * bias * csum + hw_valid * bias * bias
    # Tiny (Cout,Cout)x(Cout,1) group-mixing matmuls (gmat already divides by
    # group_size * n_valid_pixels).
    mean = jnp.dot(gmat_ref[...], zsum, preferred_element_type=jnp.float32)
    meansq = jnp.dot(gmat_ref[...], zsq, preferred_element_type=jnp.float32)
    # TODO(synk): E[x^2]-E[x]^2 is cancellation-prone at production H*W; switch
    # to a two-pass / Welford GroupNorm when tiling the spatial axis.
    var = jnp.maximum(meansq - mean * mean, 0.0)
    inv = jax.lax.rsqrt(var + eps)

    # --- fused affine + ReLU epilogue; zero the wrap-around pad columns -----
    scale = inv * gamma_ref[...]                              # (Cout, 1)
    shift = (bias - mean) * scale + beta_ref[...]             # (Cout, 1)
    y = jnp.maximum(conv * scale + shift, 0.0)
    out_ref[0] = jnp.where(valid, y, 0.0)


# ------------------------------ glue (JAX) --------------------------------- #
def conv2d_groupnorm_relu(x, w, b, gamma, beta, *, stride=1, padding=0,
                          dilation=1, n_groups=16, eps=1e-5):
    # x: (N, Cin, H, W) NCHW (PyTorch convention);  w: (Cout, Cin, k, k) OIHW
    n, cin, h, wdt = x.shape
    cout, cin_w, k, k_w = w.shape
    assert cin_w == cin and k_w == k, "weight shape mismatch"
    assert cout % n_groups == 0, "n_filters must be divisible by n_groups"
    assert stride == 1, "only stride=1 supported by the fused kernel"
    assert dilation >= 1

    hp, wp = h + 2 * padding, wdt + 2 * padding
    ho, wo = hp - dilation * (k - 1), wp - dilation * (k - 1)
    assert ho > 0 and wo > 0
    pout = ho * wp                        # conv computed on the Wp-wide row grid
    hw_valid = ho * wo                    # number of real output pixels
    cin_p = ((cin + 7) // 8) * 8          # sublane-align tap blocks in scratch
    flat_min = hp * wp + dilation * (k - 1)       # max window end over all taps
    flat = ((flat_min + 127) // 128) * 128        # lane-align the flat axis

    # Activation: pad channels -> pad spatially -> flatten -> lane-pad -> bf16.
    xp = jnp.pad(x, ((0, 0), (0, cin_p - cin),
                     (padding, padding), (padding, padding)))
    xf = xp.reshape(n, cin_p, hp * wp)
    xf = jnp.pad(xf, ((0, 0), (0, 0), (0, flat - hp * wp))).astype(jnp.bfloat16)

    # Weights: (Cout, k*k*Cin_pad), column index = (i*k + j)*Cin_pad + c, bf16.
    w_p = jnp.pad(w, ((0, 0), (0, cin_p - cin), (0, 0), (0, 0)))
    w2 = w_p.transpose(0, 2, 3, 1).reshape(cout, k * k * cin_p).astype(jnp.bfloat16)

    # Group-membership averaging matrix (divides by group_size * n_valid_pixels).
    cpg = cout // n_groups
    gids = jnp.arange(cout) // cpg
    gmat = (gids[:, None] == gids[None, :]).astype(jnp.float32) / float(cpg * hw_valid)

    bias_c = b.reshape(cout, 1).astype(jnp.float32)
    gamma_c = gamma.reshape(cout, 1).astype(jnp.float32)
    beta_c = beta.reshape(cout, 1).astype(jnp.float32)

    cost = pl.CostEstimate(
        flops=2 * n * cout * k * k * cin * ho * wo,
        transcendentals=0,
        bytes_accessed=(xf.size * 2 + w2.size * 2 + n * cout * pout * 4
                        + 3 * cout * 4 + cout * cout * 4))

    out_flat = pl.pallas_call(
        functools.partial(cgr_kernel, k=k, dilation=dilation, wp=wp, wo=wo,
                          pout=pout, hw_valid=float(hw_valid), eps=eps),
        out_shape=jax.ShapeDtypeStruct((n, cout, pout), jnp.float32),
        grid_spec=pltpu.PrefetchScalarGridSpec(
            num_scalar_prefetch=0,
            grid=(n,),
            in_specs=[
                pl.BlockSpec((1, cin_p, flat), lambda bi: (bi, 0, 0)),
                pl.BlockSpec((cout, k * k * cin_p), lambda bi: (0, 0)),
                pl.BlockSpec((cout, 1), lambda bi: (0, 0)),
                pl.BlockSpec((cout, 1), lambda bi: (0, 0)),
                pl.BlockSpec((cout, 1), lambda bi: (0, 0)),
                pl.BlockSpec((cout, cout), lambda bi: (0, 0)),
            ],
            out_specs=pl.BlockSpec((1, cout, pout), lambda bi: (bi, 0, 0)),
            scratch_shapes=[pltpu.VMEM((k * k * cin_p, pout), jnp.bfloat16)],
        ),
        compiler_params=pltpu.CompilerParams(
            dimension_semantics=("parallel",)),
        cost_estimate=cost,
    )(xf, w2, bias_c, gamma_c, beta_c, gmat)

    # Drop the pad columns of the Wp-wide row grid -> NCHW output, no transpose.
    return out_flat.reshape(n, cout, ho, wp)[:, :, :, :wo]


# --------------------------- pure-JAX reference ----------------------------- #
def reference(x, w, b, gamma, beta, *, stride, padding, dilation=1, n_groups,
              eps=1e-5):
    y = jax.lax.conv_general_dilated(
        x, w, (stride, stride), ((padding, padding), (padding, padding)),
        rhs_dilation=(dilation, dilation),
        dimension_numbers=("NCHW", "OIHW", "NCHW"),
        precision=jax.lax.Precision.HIGHEST)
    y = y + b[None, :, None, None]
    n, c, hh, ww = y.shape
    yg = y.reshape(n, n_groups, c // n_groups, hh, ww)
    mean = yg.mean(axis=(2, 3, 4), keepdims=True)
    var = ((yg - mean) ** 2).mean(axis=(2, 3, 4), keepdims=True)
    yn = ((yg - mean) / jnp.sqrt(var + eps)).reshape(n, c, hh, ww)
    out = yn * gamma[None, :, None, None] + beta[None, :, None, None]
    return jnp.maximum(out, 0.0)


if __name__ == "__main__":
    # Module hyperparameters (conv2DGroupNormRelu): in_channels=4, n_filters=32,
    # k_size=3, stride=1, padding=1, n_groups=16.
    N, CIN, H, W = 2, 4, 16, 16
    COUT, K, STRIDE, PAD, NG = 32, 3, 1, 1, 16

    key = jax.random.PRNGKey(0)
    kx, kw, kb, kg, kbt = jax.random.split(key, 5)
    x = jax.random.normal(kx, (N, CIN, H, W), dtype=jnp.float32)
    w = jax.random.normal(kw, (COUT, CIN, K, K), dtype=jnp.float32) * 0.1
    b = jax.random.normal(kb, (COUT,), dtype=jnp.float32) * 0.1
    gamma = 1.0 + 0.1 * jax.random.normal(kg, (COUT,), dtype=jnp.float32)
    beta = 0.1 * jax.random.normal(kbt, (COUT,), dtype=jnp.float32)

    out = conv2d_groupnorm_relu(x, w, b, gamma, beta,
                                stride=STRIDE, padding=PAD, n_groups=NG)
    out = jax.block_until_ready(out)
    assert out.shape == (N, COUT, H, W)

    # Full-precision module semantics (loose tol: bf16 MXU operands are a
    # deliberate perf/precision tradeoff).
    ref_f32 = reference(x, w, b, gamma, beta,
                        stride=STRIDE, padding=PAD, n_groups=NG)
    assert jnp.max(jnp.abs(out - ref_f32)) < 1e-1, "mismatch vs f32 reference"

    # bf16-consistent reference isolates the kernel's math from the cast.
    xb = x.astype(jnp.bfloat16).astype(jnp.float32)
    wb = w.astype(jnp.bfloat16).astype(jnp.float32)
    ref_b16 = reference(xb, wb, b, gamma, beta,
                        stride=STRIDE, padding=PAD, n_groups=NG)
    assert jnp.max(jnp.abs(out - ref_b16)) < 2e-3, "mismatch vs bf16 reference"

    print("KERNEL_OK")
</pallas_src>

<mosaic_0001>
module attributes {stable_mosaic.version = 11 : i64} {
  func.func @cgr_kernel(%arg0: i32, %arg1: memref<1x8x384xbf16, #tpu.memory_space<vmem>>, %arg2: memref<32x72xbf16, #tpu.memory_space<vmem>>, %arg3: memref<32x1xf32, #tpu.memory_space<vmem>>, %arg4: memref<32x1xf32, #tpu.memory_space<vmem>>, %arg5: memref<32x1xf32, #tpu.memory_space<vmem>>, %arg6: memref<32x32xf32, #tpu.memory_space<vmem>>, %arg7: memref<1x32x288xf32, #tpu.memory_space<vmem>>, %arg8: memref<72x288xbf16, #tpu.memory_space<vmem>>) attributes {dimension_semantics = [#tpu.dimension_semantics<parallel>], iteration_bounds = array<i64: 2>, scalar_prefetch = 0 : i64, scratch_operands = 1 : i64, tpu.core_type = #tpu.core_type<tc>, window_params = [{transform_indices = @transform_0, window_bounds = array<i64: 1, 8, 384>}, {pipeline_mode = #tpu.pipeline_mode<synchronous>, transform_indices = @transform_1, window_bounds = array<i64: 32, 72>}, {pipeline_mode = #tpu.pipeline_mode<synchronous>, transform_indices = @transform_2, window_bounds = array<i64: 32, 1>}, {pipeline_mode = #tpu.pipeline_mode<synchronous>, transform_indices = @transform_3, window_bounds = array<i64: 32, 1>}, {pipeline_mode = #tpu.pipeline_mode<synchronous>, transform_indices = @transform_4, window_bounds = array<i64: 32, 1>}, {pipeline_mode = #tpu.pipeline_mode<synchronous>, transform_indices = @transform_5, window_bounds = array<i64: 32, 32>}, {transform_indices = @transform_6, window_bounds = array<i64: 1, 32, 288>}]} {
    %c0 = arith.constant 0 : index
    %c0_0 = arith.constant 0 : index
    %c0_1 = arith.constant 0 : index
    %0 = vector.load %arg1[%c0, %c0_0, %c0_1] : memref<1x8x384xbf16, #tpu.memory_space<vmem>>, vector<1x8x288xbf16>
    %1 = vector.shape_cast %0 : vector<1x8x288xbf16> to vector<8x288xbf16>
    %c0_2 = arith.constant 0 : index
    %c0_3 = arith.constant 0 : index
    %2 = vector.load %arg8[%c0_2, %c0_3] : memref<72x288xbf16, #tpu.memory_space<vmem>>, vector<8x288xbf16>
    tpu.vector_store %arg8[%c0_2, %c0_3], %1 {strides = array<i32>} : memref<72x288xbf16, #tpu.memory_space<vmem>>, vector<8x288xbf16>,
    %c0_4 = arith.constant 0 : index
    %c0_5 = arith.constant 0 : index
    %c1 = arith.constant 1 : index
    %3 = vector.load %arg1[%c0_4, %c0_5, %c1] : memref<1x8x384xbf16, #tpu.memory_space<vmem>>, vector<1x8x288xbf16>
    %4 = vector.shape_cast %3 : vector<1x8x288xbf16> to vector<8x288xbf16>
    %c8 = arith.constant 8 : index
    %c0_6 = arith.constant 0 : index
    %5 = vector.load %arg8[%c8, %c0_6] : memref<72x288xbf16, #tpu.memory_space<vmem>>, vector<8x288xbf16>
    tpu.vector_store %arg8[%c8, %c0_6], %4 {strides = array<i32>} : memref<72x288xbf16, #tpu.memory_space<vmem>>, vector<8x288xbf16>,
    %c0_7 = arith.constant 0 : index
    %c0_8 = arith.constant 0 : index
    %c2 = arith.constant 2 : index
    %6 = vector.load %arg1[%c0_7, %c0_8, %c2] : memref<1x8x384xbf16, #tpu.memory_space<vmem>>, vector<1x8x288xbf16>
    %7 = vector.shape_cast %6 : vector<1x8x288xbf16> to vector<8x288xbf16>
    %c16 = arith.constant 16 : index
    %c0_9 = arith.constant 0 : index
    %8 = vector.load %arg8[%c16, %c0_9] : memref<72x288xbf16, #tpu.memory_space<vmem>>, vector<8x288xbf16>
    tpu.vector_store %arg8[%c16, %c0_9], %7 {strides = array<i32>} : memref<72x288xbf16, #tpu.memory_space<vmem>>, vector<8x288xbf16>,
    %c0_10 = arith.constant 0 : index
    %c0_11 = arith.constant 0 : index
    %c18 = arith.constant 18 : index
    %9 = vector.load %arg1[%c0_10, %c0_11, %c18] : memref<1x8x384xbf16, #tpu.memory_space<vmem>>, vector<1x8x288xbf16>
    %10 = vector.shape_cast %9 : vector<1x8x288xbf16> to vector<8x288xbf16>
    %c24 = arith.constant 24 : index
    %c0_12 = arith.constant 0 : index
    %11 = vector.load %arg8[%c24, %c0_12] : memref<72x288xbf16, #tpu.memory_space<vmem>>, vector<8x288xbf16>
    tpu.vector_store %arg8[%c24, %c0_12], %10 {strides = array<i32>} : memref<72x288xbf16, #tpu.memory_space<vmem>>, vector<8x288xbf16>,
    %c0_13 = arith.constant 0 : index
    %c0_14 = arith.constant 0 : index
    %c19 = arith.constant 19 : index
    %12 = vector.load %arg1[%c0_13, %c0_14, %c19] : memref<1x8x384xbf16, #tpu.memory_space<vmem>>, vector<1x8x288xbf16>
    %13 = vector.shape_cast %12 : vector<1x8x288xbf16> to vector<8x288xbf16>
    %c32 = arith.constant 32 : index
    %c0_15 = arith.constant 0 : index
    %14 = vector.load %arg8[%c32, %c0_15] : memref<72x288xbf16, #tpu.memory_space<vmem>>, vector<8x288xbf16>
    tpu.vector_store %arg8[%c32, %c0_15], %13 {strides = array<i32>} : memref<72x288xbf16, #tpu.memory_space<vmem>>, vector<8x288xbf16>,
    %c0_16 = arith.constant 0 : index
    %c0_17 = arith.constant 0 : index
    %c20 = arith.constant 20 : index
    %15 = vector.load %arg1[%c0_16, %c0_17, %c20] : memref<1x8x384xbf16, #tpu.memory_space<vmem>>, vector<1x8x288xbf16>
    %16 = vector.shape_cast %15 : vector<1x8x288xbf16> to vector<8x288xbf16>
    %c40 = arith.constant 40 : index
    %c0_18 = arith.constant 0 : index
    %17 = vector.load %arg8[%c40, %c0_18] : memref<72x288xbf16, #tpu.memory_space<vmem>>, vector<8x288xbf16>
    tpu.vector_store %arg8[%c40, %c0_18], %16 {strides = array<i32>} : memref<72x288xbf16, #tpu.memory_space<vmem>>, vector<8x288xbf16>,
    %c0_19 = arith.constant 0 : index
    %c0_20 = arith.constant 0 : index
    %c36 = arith.constant 36 : index
    %18 = vector.load %arg1[%c0_19, %c0_20, %c36] : memref<1x8x384xbf16, #tpu.memory_space<vmem>>, vector<1x8x288xbf16>
    %19 = vector.shape_cast %18 : vector<1x8x288xbf16> to vector<8x288xbf16>
    %c48 = arith.constant 48 : index
    %c0_21 = arith.constant 0 : index
    %20 = vector.load %arg8[%c48, %c0_21] : memref<72x288xbf16, #tpu.memory_space<vmem>>, vector<8x288xbf16>
    tpu.vector_store %arg8[%c48, %c0_21], %19 {strides = array<i32>} : memref<72x288xbf16, #tpu.memory_space<vmem>>, vector<8x288xbf16>,
    %c0_22 = arith.constant 0 : index
    %c0_23 = arith.constant 0 : index
    %c37 = arith.constant 37 : index
    %21 = vector.load %arg1[%c0_22, %c0_23, %c37] : memref<1x8x384xbf16, #tpu.memory_space<vmem>>, vector<1x8x288xbf16>
    %22 = vector.shape_cast %21 : vector<1x8x288xbf16> to vector<8x288xbf16>
    %c56 = arith.constant 56 : index
    %c0_24 = arith.constant 0 : index
    %23 = vector.load %arg8[%c56, %c0_24] : memref<72x288xbf16, #tpu.memory_space<vmem>>, vector<8x288xbf16>
    tpu.vector_store %arg8[%c56, %c0_24], %22 {strides = array<i32>} : memref<72x288xbf16, #tpu.memory_space<vmem>>, vector<8x288xbf16>,
    %c0_25 = arith.constant 0 : index
    %c0_26 = arith.constant 0 : index
    %c38 = arith.constant 38 : index
    %24 = vector.load %arg1[%c0_25, %c0_26, %c38] : memref<1x8x384xbf16, #tpu.memory_space<vmem>>, vector<1x8x288xbf16>
    %25 = vector.shape_cast %24 : vector<1x8x288xbf16> to vector<8x288xbf16>
    %c64 = arith.constant 64 : index
    %c0_27 = arith.constant 0 : index
    %26 = vector.load %arg8[%c64, %c0_27] : memref<72x288xbf16, #tpu.memory_space<vmem>>, vector<8x288xbf16>
    tpu.vector_store %arg8[%c64, %c0_27], %25 {strides = array<i32>} : memref<72x288xbf16, #tpu.memory_space<vmem>>, vector<8x288xbf16>,
    %c0_28 = arith.constant 0 : index
    %c0_29 = arith.constant 0 : index
    %27 = vector.load %arg2[%c0_28, %c0_29] : memref<32x72xbf16, #tpu.memory_space<vmem>>, vector<32x72xbf16>
    %c0_30 = arith.constant 0 : index
    %c0_31 = arith.constant 0 : index
    %28 = vector.load %arg8[%c0_30, %c0_31] : memref<72x288xbf16, #tpu.memory_space<vmem>>, vector<72x288xbf16>
    %cst = arith.constant dense<0.000000e+00> : vector<32x288xf32>
    %29 = tpu.matmul %27, %28, %cst {dimension_numbers = #tpu.dot_dimension_numbers<[1], [0], [0], [1], [0, 0, 1, 1], [], []>} : vector<32x72xbf16>, vector<72x288xbf16>, vector<32x288xf32> -> vector<32x288xf32>
    %30 = tpu.iota {dimensions = array<i32: 1>} : vector<1x288xi32>
    %c18_i32 = arith.constant 18 : i32
    %c0_i32 = arith.constant 0 : i32
    %31 = arith.cmpi eq, %c18_i32, %c0_i32 : i32
    %c1_i32 = arith.constant 1 : i32
    %32 = arith.select %31, %c1_i32, %c18_i32 : i32
    %33 = vector.broadcast %32 : i32 to vector<1x288xi32>
    %34 = arith.remsi %30, %33 : vector<1x288xi32>
    %c0_i32_32 = arith.constant 0 : i32
    %35 = vector.broadcast %c0_i32_32 : i32 to vector<1x288xi32>
    %36 = arith.cmpi ne, %34, %35 : vector<1x288xi32>
    %c0_i32_33 = arith.constant 0 : i32
    %37 = vector.broadcast %c0_i32_33 : i32 to vector<1x288xi32>
    %38 = arith.cmpi slt, %34, %37 : vector<1x288xi32>
    %c0_i32_34 = arith.constant 0 : i32
    %39 = arith.cmpi slt, %32, %c0_i32_34 : i32
    %40 = vector.broadcast %39 : i1 to vector<1x288xi1>
    %41 = vector.broadcast %40 : vector<1x288xi1> to vector<1x288xi1>
    %42 = arith.xori %38, %41 : vector<1x288xi1>
    %43 = arith.andi %42, %36 : vector<1x288xi1>
    %44 = vector.broadcast %32 : i32 to vector<1x288xi32>
    %45 = arith.addi %34, %44 : vector<1x288xi32>
    %46 = arith.select %43, %45, %34 : vector<1x288xi1>, vector<1x288xi32>
    %c16_i32 = arith.constant 16 : i32
    %47 = vector.broadcast %c16_i32 : i32 to vector<1x288xi32>
    %48 = arith.cmpi slt, %46, %47 : vector<1x288xi32>
    %49 = arith.mulf %29, %29 : vector<32x288xf32>
    %50 = tpu.concatenate %29, %49 in 0 : vector<32x288xf32>, vector<32x288xf32> -> vector<64x288xf32>
    %cst_35 = arith.constant 0.000000e+00 : f32
    %51 = vector.shape_cast %48 : vector<1x288xi1> to vector<1x288xi1>
    %52 = vector.broadcast %51 : vector<1x288xi1> to vector<64x288xi1>
    %53 = vector.broadcast %cst_35 : f32 to vector<64x288xf32>
    %54 = arith.select %52, %50, %53 : vector<64x288xi1>, vector<64x288xf32>
    %cst_36 = arith.constant dense<0.000000e+00> : vector<64xf32>
    %55 = vector.multi_reduction <add>, %54, %cst_36 [1] : vector<64x288xf32> to vector<64xf32>
    %56 = vector.shape_cast %55 : vector<64xf32> to vector<64x1xf32>
    %57 = vector.extract_strided_slice %56 {offsets = [0, 0], sizes = [32, 1], strides = [1, 1]} : vector<64x1xf32> to vector<32x1xf32>
    %58 = vector.extract_strided_slice %56 {offsets = [32, 0], sizes = [32, 1], strides = [1, 1]} : vector<64x1xf32> to vector<32x1xf32>
    %c0_37 = arith.constant 0 : index
    %c0_38 = arith.constant 0 : index
    %59 = vector.load %arg3[%c0_37, %c0_38] : memref<32x1xf32, #tpu.memory_space<vmem>>, vector<32x1xf32>
    %cst_39 = arith.constant 2.560000e+02 : f32
    %60 = vector.broadcast %cst_39 : f32 to vector<32x1xf32>
    %61 = arith.mulf %60, %59 : vector<32x1xf32>
    %62 = arith.addf %57, %61 : vector<32x1xf32>
    %cst_40 = arith.constant 2.000000e+00 : f32
    %63 = vector.broadcast %cst_40 : f32 to vector<32x1xf32>
    %64 = arith.mulf %63, %59 : vector<32x1xf32>
    %65 = arith.mulf %64, %57 : vector<32x1xf32>
    %66 = arith.addf %58, %65 : vector<32x1xf32>
    %cst_41 = arith.constant 2.560000e+02 : f32
    %67 = vector.broadcast %cst_41 : f32 to vector<32x1xf32>
    %68 = arith.mulf %67, %59 : vector<32x1xf32>
    %69 = arith.mulf %68, %59 : vector<32x1xf32>
    %70 = arith.addf %66, %69 : vector<32x1xf32>
    %c0_42 = arith.constant 0 : index
    %c0_43 = arith.constant 0 : index
    %71 = vector.load %arg6[%c0_42, %c0_43] : memref<32x32xf32, #tpu.memory_space<vmem>>, vector<32x32xf32>
    %cst_44 = arith.constant dense<0.000000e+00> : vector<32x1xf32>
    %72 = tpu.matmul %71, %62, %cst_44 {dimension_numbers = #tpu.dot_dimension_numbers<[1], [0], [0], [1], [0, 0, 1, 1], [], []>} : vector<32x32xf32>, vector<32x1xf32>, vector<32x1xf32> -> vector<32x1xf32>
    %c0_45 = arith.constant 0 : index
    %c0_46 = arith.constant 0 : index
    %73 = vector.load %arg6[%c0_45, %c0_46] : memref<32x32xf32, #tpu.memory_space<vmem>>, vector<32x32xf32>
    %cst_47 = arith.constant dense<0.000000e+00> : vector<32x1xf32>
    %74 = tpu.matmul %73, %70, %cst_47 {dimension_numbers = #tpu.dot_dimension_numbers<[1], [0], [0], [1], [0, 0, 1, 1], [], []>} : vector<32x32xf32>, vector<32x1xf32>, vector<32x1xf32> -> vector<32x1xf32>
    %75 = arith.mulf %72, %72 : vector<32x1xf32>
    %76 = arith.subf %74, %75 : vector<32x1xf32>
    %cst_48 = arith.constant 0.000000e+00 : f32
    %77 = vector.broadcast %cst_48 : f32 to vector<32x1xf32>
    %78 = arith.maximumf %76, %77 : vector<32x1xf32>
    %cst_49 = arith.constant 9.99999974E-6 : f32
    %79 = vector.broadcast %cst_49 : f32 to vector<32x1xf32>
    %80 = arith.addf %78, %79 : vector<32x1xf32>
    %81 = math.rsqrt %80 : vector<32x1xf32>
    %c0_50 = arith.constant 0 : index
    %c0_51 = arith.constant 0 : index
    %82 = vector.load %arg4[%c0_50, %c0_51] : memref<32x1xf32, #tpu.memory_space<vmem>>, vector<32x1xf32>
    %83 = arith.mulf %81, %82 : vector<32x1xf32>
    %84 = arith.subf %59, %72 : vector<32x1xf32>
    %85 = arith.mulf %84, %83 : vector<32x1xf32>
    %c0_52 = arith.constant 0 : index
    %c0_53 = arith.constant 0 : index
    %86 = vector.load %arg5[%c0_52, %c0_53] : memref<32x1xf32, #tpu.memory_space<vmem>>, vector<32x1xf32>
    %87 = arith.addf %85, %86 : vector<32x1xf32>
    %88 = vector.broadcast %83 : vector<32x1xf32> to vector<32x288xf32>
    %89 = arith.mulf %29, %88 : vector<32x288xf32>
    %90 = vector.broadcast %87 : vector<32x1xf32> to vector<32x288xf32>
    %91 = arith.addf %89, %90 : vector<32x288xf32>
    %cst_54 = arith.constant 0.000000e+00 : f32
    %92 = vector.broadcast %cst_54 : f32 to vector<32x288xf32>
    %93 = arith.maximumf %91, %92 : vector<32x288xf32>
    %cst_55 = arith.constant 0.000000e+00 : f32
    %94 = vector.shape_cast %48 : vector<1x288xi1> to vector<1x288xi1>
    %95 = vector.broadcast %94 : vector<1x288xi1> to vector<32x288xi1>
    %96 = vector.broadcast %cst_55 : f32 to vector<32x288xf32>
    %97 = arith.select %95, %93, %96 : vector<32x288xi1>, vector<32x288xf32>
    %c0_56 = arith.constant 0 : index
    %c0_57 = arith.constant 0 : index
    %c0_58 = arith.constant 0 : index
    %98 = vector.load %arg7[%c0_56, %c0_57, %c0_58] : memref<1x32x288xf32, #tpu.memory_space<vmem>>, vector<1x32x288xf32>
    %99 = vector.shape_cast %98 : vector<1x32x288xf32> to vector<32x288xf32>
    %100 = vector.shape_cast %97 : vector<32x288xf32> to vector<1x32x288xf32>
    tpu.vector_store %arg7[%c0_56, %c0_57, %c0_58], %100 {strides = array<i32>} : memref<1x32x288xf32, #tpu.memory_space<vmem>>, vector<1x32x288xf32>,
    return
  }
  func.func @transform_0(%arg0: i32) -> (i32, i32, i32) {
    %c0_i32 = arith.constant 0 : i32
    %c0_i32_0 = arith.constant 0 : i32
    %c0_i32_1 = arith.constant 0 : i32
    return %arg0, %c0_i32, %c0_i32_0 : i32, i32, i32
  }
  func.func @transform_1(%arg0: i32) -> (i32, i32) {
    %c0_i32 = arith.constant 0 : i32
    %c0_i32_0 = arith.constant 0 : i32
    %c0_i32_1 = arith.constant 0 : i32
    return %c0_i32, %c0_i32_0 : i32, i32
  }
  func.func @transform_2(%arg0: i32) -> (i32, i32) {
    %c0_i32 = arith.constant 0 : i32
    %c0_i32_0 = arith.constant 0 : i32
    %c0_i32_1 = arith.constant 0 : i32
    return %c0_i32, %c0_i32_0 : i32, i32
  }
  func.func @transform_3(%arg0: i32) -> (i32, i32) {
    %c0_i32 = arith.constant 0 : i32
    %c0_i32_0 = arith.constant 0 : i32
    %c0_i32_1 = arith.constant 0 : i32
    return %c0_i32, %c0_i32_0 : i32, i32
  }
  func.func @transform_4(%arg0: i32) -> (i32, i32) {
    %c0_i32 = arith.constant 0 : i32
    %c0_i32_0 = arith.constant 0 : i32
    %c0_i32_1 = arith.constant 0 : i32
    return %c0_i32, %c0_i32_0 : i32, i32
  }
  func.func @transform_5(%arg0: i32) -> (i32, i32) {
    %c0_i32 = arith.constant 0 : i32
    %c0_i32_0 = arith.constant 0 : i32
    %c0_i32_1 = arith.constant 0 : i32
    return %c0_i32, %c0_i32_0 : i32, i32
  }
  func.func @transform_6(%arg0: i32) -> (i32, i32, i32) {
    %c0_i32 = arith.constant 0 : i32
    %c0_i32_0 = arith.constant 0 : i32
    %c0_i32_1 = arith.constant 0 : i32
    return %arg0, %c0_i32, %c0_i32_0 : i32, i32, i32
  }
}

</mosaic_0001>

<llo_original>
// kernel: tpu_custom_call.1
$region0: #{tpu_custom_call.1}
  #allocation0 [shape = 'u32[]', space=smem, size = 0x4, offset = 0x4, fixed_abs, tag = 'smem constant byte address 0x4 - core index']
  #allocation1 [shape = 'u32[72,128]{1,0:T(1,128)}', space=vmem, size = 0x9000, scoped, tag = 'internal scratch']
  #allocation2 [shape = 'bf16[72,288]{1,0:T(8,128)(2,1)}', space=vmem, size = 0xd800, scoped, tag = 'scratch operand']
  %s0 = inlined_call_operand.vmem [shape: bf16[2,8,384], index: 0, kind: input, shape index: {}]
  %s1 = inlined_call_operand.vmem [shape: bf16[32,72], index: 1, kind: input, shape index: {}]
  %s2 = inlined_call_operand.vmem [shape: f32[32,1], index: 2, kind: input, shape index: {}]
  %s3 = inlined_call_operand.vmem [shape: f32[32,1], index: 3, kind: input, shape index: {}]
  %s4 = inlined_call_operand.vmem [shape: f32[32,1], index: 4, kind: input, shape index: {}]
  %s5 = inlined_call_operand.vmem [shape: f32[32,32], index: 5, kind: input, shape index: {}]
  %s6 = inlined_call_operand.hbm [shape: f32[2,32,288], index: 6, kind: output, shape index: {}]
  %s7 = sld [smem:[#allocation0]]
  $region57: #{tpu_custom_call.1} parent=0
    _
  %s9 = ssub.s32 1, %s7
  %s10 = scalar_select 0, %s9, %s7
  $region1: #{tpu_custom_call.1} parent=0
    #allocation3 [shape = 'u8[98304]{0}', space=vmem, size = 0x18000, scoped, tag = 'output window, operand 0']
    #allocation4 [shape = 's32[2]{0}', space=sflag, size = 0x8, scoped, tag = 'scoped memory for tpu_custom_call.1']
    %11 = vsyncpa [#allocation4], 0
    %s12 = scalar_lea.sflag [#allocation4], 1
    %13 = vsyncpa %s12, 0
    loop: start=0, step=1, limit=4
    $region2: #{tpu_custom_call.1} parent=1 // loop_pre_header
      _
    $region3: #{tpu_custom_call.1} parent=1 // loop_header
      %s15 = sphi 0, %s19
      %p16 = scmp.ge.s32.totalorder %s15, 4
      %s25 = sphi 0, %s27
      %s28 = sphi 0, %s25
      %s29 = sphi 0, %s28
      %s45 = sphi 0, %s29
      %s49 = sphi 0, %s49
      %s51 = sphi 0, %s49
      %s52 = sphi 0, %s51
      %s66 = sphi 0, %s52
      %s70 = sphi 0, %s70
      %s72 = sphi 0, %s70
      %s73 = sphi 0, %s72
      %s87 = sphi 0, %s73
      %s91 = sphi 0, %s91
      %s93 = sphi 0, %s91
      %s94 = sphi 0, %s93
      %s108 = sphi 0, %s94
      %s112 = sphi 0, %s112
      %s114 = sphi 0, %s112
      %s115 = sphi 0, %s114
      %s129 = sphi 0, %s115
      %s133 = sphi 0, %s133
      %s135 = sphi 0, %s133
      %s136 = sphi 0, %s135
      %s150 = sphi 0, %s136
      %s156 = sphi 0, %s158
      %s159 = sphi 0, %s156
      %s160 = sphi 0, %s159
      %s176 = sphi 0, %s160
    $region4: #{tpu_custom_call.1} parent=1 // loop_header_branch
      %18 = sbr.rel (%p16) target = $region8
    $region5: #{tpu_custom_call.1} parent=1 // loop_body
      %s20 = ssub.s32 %s15, 1
      %s21 = ssub.s32 %s15, 2
      %s22 = sadd.s32 %s15, 1
      %s23 = ssub.s32 %s15, %s22
      %p24 = scmp.eq.s32.totalorder %s23, 0
      %s26 = sadd.s32 %s25, 1
      %s27 = scalar_select %p24, %s25, %s26
      %p30 = pneg %p24
      %p31 = scmp.eq.s32.totalorder %s15, 1
      %p32 = por %p30, %p31
      %p33 = scmp.ne.s32.totalorder %s25, %s28
      %p34 = scmp.eq.s32.totalorder %s15, 0
      %p35 = por %p33, %p34
      %p36 = scmp.ne.s32.totalorder %s25, %s28
      %p37 = scmp.eq.s32.totalorder %s20, 1
      %p38 = por %p36, %p37
      %p39 = scmp.ne.s32.totalorder %s28, %s29
      %p40 = scmp.eq.s32.totalorder %s20, 0
      %p41 = por %p39, %p40
      %p42 = scmp.ne.s32.totalorder %s28, %s29
      %p43 = scmp.eq.s32.totalorder %s21, 1
      %p44 = por %p42, %p43
      %p46 = scmp.ne.s32.totalorder %s29, %s45
      %p47 = scmp.eq.s32.totalorder %s21, 0
      %p48 = por %p46, %p47
      %s50 = sadd.s32 %s49, 1
      %p53 = scmp.eq.s32.totalorder %s15, 1
      %p54 = scmp.ne.s32.totalorder %s49, %s51
      %p55 = scmp.eq.s32.totalorder %s15, 0
      %p56 = por %p54, %p55
      %p57 = scmp.ne.s32.totalorder %s49, %s51
      %p58 = scmp.eq.s32.totalorder %s20, 1
      %p59 = por %p57, %p58
      %p60 = scmp.ne.s32.totalorder %s51, %s52
      %p61 = scmp.eq.s32.totalorder %s20, 0
      %p62 = por %p60, %p61
      %p63 = scmp.ne.s32.totalorder %s51, %s52
      %p64 = scmp.eq.s32.totalorder %s21, 1
      %p65 = por %p63, %p64
      %p67 = scmp.ne.s32.totalorder %s52, %s66
      %p68 = scmp.eq.s32.totalorder %s21, 0
      %p69 = por %p67, %p68
      %s71 = sadd.s32 %s70, 1
      %p74 = scmp.eq.s32.totalorder %s15, 1
      %p75 = scmp.ne.s32.totalorder %s70, %s72
      %p76 = scmp.eq.s32.totalorder %s15, 0
      %p77 = por %p75, %p76
      %p78 = scmp.ne.s32.totalorder %s70, %s72
      %p79 = scmp.eq.s32.totalorder %s20, 1
      %p80 = por %p78, %p79
      %p81 = scmp.ne.s32.totalorder %s72, %s73
      %p82 = scmp.eq.s32.totalorder %s20, 0
      %p83 = por %p81, %p82
      %p84 = scmp.ne.s32.totalorder %s72, %s73
      %p85 = scmp.eq.s32.totalorder %s21, 1
      %p86 = por %p84, %p85
      %p88 = scmp.ne.s32.totalorder %s73, %s87
      %p89 = scmp.eq.s32.totalorder %s21, 0
      %p90 = por %p88, %p89
      %s92 = sadd.s32 %s91, 1
      %p95 = scmp.eq.s32.totalorder %s15, 1
      %p96 = scmp.ne.s32.totalorder %s91, %s93
      %p97 = scmp.eq.s32.totalorder %s15, 0
      %p98 = por %p96, %p97
      %p99 = scmp.ne.s32.totalorder %s91, %s93
      %p100 = scmp.eq.s32.totalorder %s20, 1
      %p101 = por %p99, %p100
      %p102 = scmp.ne.s32.totalorder %s93, %s94
      %p103 = scmp.eq.s32.totalorder %s20, 0
      %p104 = por %p102, %p103
      %p105 = scmp.ne.s32.totalorder %s93, %s94
      %p106 = scmp.eq.s32.totalorder %s21, 1
      %p107 = por %p105, %p106
      %p109 = scmp.ne.s32.totalorder %s94, %s108
      %p110 = scmp.eq.s32.totalorder %s21, 0
      %p111 = por %p109, %p110
      %s113 = sadd.s32 %s112, 1
      %p116 = scmp.eq.s32.totalorder %s15, 1
      %p117 = scmp.ne.s32.totalorder %s112, %s114
      %p118 = scmp.eq.s32.totalorder %s15, 0
      %p119 = por %p117, %p118
      %p120 = scmp.ne.s32.totalorder %s112, %s114
      %p121 = scmp.eq.s32.totalorder %s20, 1
      %p122 = por %p120, %p121
      %p123 = scmp.ne.s32.totalorder %s114, %s115
      %p124 = scmp.eq.s32.totalorder %s20, 0
      %p125 = por %p123, %p124
      %p126 = scmp.ne.s32.totalorder %s114, %s115
      %p127 = scmp.eq.s32.totalorder %s21, 1
      %p128 = por %p126, %p127
      %p130 = scmp.ne.s32.totalorder %s115, %s129
      %p131 = scmp.eq.s32.totalorder %s21, 0
      %p132 = por %p130, %p131
      %s134 = sadd.s32 %s133, 1
      %p137 = scmp.eq.s32.totalorder %s15, 1
      %p138 = scmp.ne.s32.totalorder %s133, %s135
      %p139 = scmp.eq.s32.totalorder %s15, 0
      %p140 = por %p138, %p139
      %p141 = scmp.ne.s32.totalorder %s133, %s135
      %p142 = scmp.eq.s32.totalorder %s20, 1
      %p143 = por %p141, %p142
      %p144 = scmp.ne.s32.totalorder %s135, %s136
      %p145 = scmp.eq.s32.totalorder %s20, 0
      %p146 = por %p144, %p145
      %p147 = scmp.ne.s32.totalorder %s135, %s136
      %p148 = scmp.eq.s32.totalorder %s21, 1
      %p149 = por %p147, %p148
      %p151 = scmp.ne.s32.totalorder %s136, %s150
      %p152 = scmp.eq.s32.totalorder %s21, 0
      %p153 = por %p151, %p152
      %s154 = ssub.s32 %s15, %s22
      %p155 = scmp.eq.s32.totalorder %s154, 0
      %s157 = sadd.s32 %s156, 1
      %s158 = scalar_select %p155, %s156, %s157
      %p161 = pneg %p155
      %p162 = scmp.eq.s32.totalorder %s15, 1
      %p163 = por %p161, %p162
      %p164 = scmp.ne.s32.totalorder %s156, %s159
      %p165 = scmp.eq.s32.totalorder %s15, 0
      %p166 = por %p164, %p165
      %p167 = scmp.ne.s32.totalorder %s156, %s159
      %p168 = scmp.eq.s32.totalorder %s20, 1
      %p169 = por %p167, %p168
      %p170 = scmp.ne.s32.totalorder %s159, %s160
      %p171 = scmp.eq.s32.totalorder %s20, 0
      %p172 = por %p170, %p171
      %p173 = scmp.ne.s32.totalorder %s159, %s160
      %p174 = scmp.eq.s32.totalorder %s21, 1
      %p175 = por %p173, %p174
      %p177 = scmp.ne.s32.totalorder %s160, %s176
      %p178 = scmp.eq.s32.totalorder %s21, 0
      %p179 = por %p177, %p178
      %p180 = scmp.le.s32.totalorder 1, %s15
      %p181 = scmp.lt.s32.totalorder %s15, 3
      %p182 = pnand %p180, %p181
      %p183 = pneg %p182
      // Predicated region
      $region9: #{tpu_custom_call.1} parent=5 // pred_check
        _
      $region10: #{tpu_custom_call.1} parent=5 // pred_check_branch
        %185 = sbr.rel (%p182) target = $region12
      $region11: #{tpu_custom_call.1} parent=5 // pred_region
        %s186 = ssub.s32 %s15, 1
        // Predicated region
        $region13: #{tpu_custom_call.1} parent=11 // pred_check
          %p187 = pneg %p62
        $region14: #{tpu_custom_call.1} parent=11 // pred_check_branch
          %189 = sbr.rel (%p187) target = $region16
        $region15: #{tpu_custom_call.1} parent=11 // pred_region
          _
        $region16: #{tpu_custom_call.1} parent=11 // pred_fallthru
          _
        // Predicated region
        $region17: #{tpu_custom_call.1} parent=11 // pred_check
          %p190 = pneg %p83
        $region18: #{tpu_custom_call.1} parent=11 // pred_check_branch
          %192 = sbr.rel (%p190) target = $region20
        $region19: #{tpu_custom_call.1} parent=11 // pred_region
          _
        $region20: #{tpu_custom_call.1} parent=11 // pred_fallthru
          _
        // Predicated region
        $region21: #{tpu_custom_call.1} parent=11 // pred_check
          %p193 = pneg %p104
        $region22: #{tpu_custom_call.1} parent=11 // pred_check_branch
          %195 = sbr.rel (%p193) target = $region24
        $region23: #{tpu_custom_call.1} parent=11 // pred_region
          _
        $region24: #{tpu_custom_call.1} parent=11 // pred_fallthru
          _
        // Predicated region
        $region25: #{tpu_custom_call.1} parent=11 // pred_check
          %p196 = pneg %p125
        $region26: #{tpu_custom_call.1} parent=11 // pred_check_branch
          %198 = sbr.rel (%p196) target = $region28
        $region27: #{tpu_custom_call.1} parent=11 // pred_region
          _
        $region28: #{tpu_custom_call.1} parent=11 // pred_fallthru
          _
        // Predicated region
        $region29: #{tpu_custom_call.1} parent=11 // pred_check
          %p199 = pneg %p146
        $region30: #{tpu_custom_call.1} parent=11 // pred_check_branch
          %201 = sbr.rel (%p199) target = $region32
        $region31: #{tpu_custom_call.1} parent=11 // pred_region
          _
        $region32: #{tpu_custom_call.1} parent=11 // pred_fallthru
          _
      $region12: #{tpu_custom_call.1} parent=5 // pred_fallthru
        _
      %p202 = scmp.lt.s32.totalorder %s15, 2
      // Predicated region
      $region33: #{tpu_custom_call.1} parent=5 // pred_check
        %p203 = pneg %p202
      $region34: #{tpu_custom_call.1} parent=5 // pred_check_branch
        %205 = sbr.rel (%p203) target = $region36
      $region35: #{tpu_custom_call.1} parent=5 // pred_region
        // Predicated region
        $region37: #{tpu_custom_call.1} parent=35 // pred_check
          %p206 = pneg %p35
        $region38: #{tpu_custom_call.1} parent=35 // pred_check_branch
          %208 = sbr.rel (%p206) target = $region40
        $region39: #{tpu_custom_call.1} parent=35 // pred_region
          %p209 = scmp.lt.s32.totalorder %s15, 1
          %s210 = scalar_select %p209, %s15, 1
          %s211 = smul.addr %s210, 3
          %s212 = smul.addr %s211, 4
          %s213 = scalar_lea.vmem %s0, %s212
        $region40: #{tpu_custom_call.1} parent=35 // pred_fallthru
          _
      $region36: #{tpu_custom_call.1} parent=5 // pred_fallthru
        _
      %p214 = scmp.le.s32.totalorder 1, %s15
      %p215 = scmp.lt.s32.totalorder %s15, 3
      %p216 = pnand %p214, %p215
      %p217 = pneg %p216
      // Predicated region
      $region41: #{tpu_custom_call.1} parent=5 // pred_check
        _
      $region42: #{tpu_custom_call.1} parent=5 // pred_check_branch
        %219 = sbr.rel (%p216) target = $region44
      $region43: #{tpu_custom_call.1} parent=5 // pred_region
        %s220 = ssub.s32 %s15, 1
        %p221 = scmp.lt.s32.totalorder %s20, 1
        %s222 = scalar_select %p221, %s20, 1
        %s223 = smul.addr %s222, 3
        %s224 = smul.addr %s223, 4
        %s225 = scalar_lea.vmem %s0, %s224
        %p226 = pneg %p41
        %p227 = pneg %p38
        %p228 = pneg %p62
        %p229 = pneg %p59
        %p230 = pneg %p83
        %p231 = pneg %p80
        %p232 = pneg %p104
        %p233 = pneg %p101
        %p234 = pneg %p125
        %p235 = pneg %p122
        %p236 = pneg %p146
        %p237 = pneg %p143
        %p238 = pneg %p172
        %p239 = pneg %p169
        %s240 = sand.u32 %s159, 1
        %s241 = scalar_lea.sflag [#allocation4], %s240
        %s242 = sand.u32 %s159, 1
        %s243 = smul.addr %s242, 96
        %s244 = scalar_lea.vmem [#allocation3], %s243
        %p245 = scmp.lt.s32.totalorder %s20, 1
        %s246 = scalar_select %p245, %s20, 1
        %s247 = smul.addr %s246, 3
        %s248 = smul.addr %s247, 4
        %s249 = scalar_lea.vmem %s0, %s248
        %v251 = vld [vmem:[%s249] sm:$0xff]
        %v252 = vld [vmem:[%s249 + $0x8] sm:$0xf]
        %253 = vst [vmem:[#allocation2] sm:$0xff] %v251
        %vm254 = vcmask 257024
        %255 = vst.msk [vmem:[#allocation2 + $0x8] sm:$0xf] %vm254, %v252
        %v256 = vld [vmem:[%s249] sm:$0xff]
        %v257 = vld [vmem:[%s249 + $0x8] sm:$0xf]
        %260 = vrot.lane.b32.xlu0 %v256, 127
        %v261 = vpop.permute.xlu0 %260
        %262 = vrot.lane.b32.xlu0 %v257, 127
        %v263 = vpop.permute.xlu0 %262
        %v264 = vrot.slane %v261, 4
        %v265 = vrot.slane %v263, 4
        %vm266 = vcmask 1043456
        %v267 = vsel %vm266, %v264, %v265
        %vm268 = vcmask 1039360
        %v269 = vsel %vm268, %v261, %v267
        %272 = vst [vmem:[#allocation2 + $0xc] sm:$0xff] %v269
        %273 = vst.msk [vmem:[#allocation2 + $0x14] sm:$0xf] %vm254, %v263
        %v274 = vld [vmem:[%s249] sm:$0xff]
        %v275 = vld [vmem:[%s249 + $0x8] sm:$0xf]
        %278 = vrot.lane.b32.xlu0 %v274, 126
        %v279 = vpop.permute.xlu0 %278
        %280 = vrot.lane.b32.xlu0 %v275, 126
        %v281 = vpop.permute.xlu0 %280
        %v282 = vrot.slane %v279, 4
        %v283 = vrot.slane %v281, 4
        %v284 = vsel %vm266, %v282, %v283
        %vm285 = vcmask 1031168
        %v286 = vsel %vm285, %v279, %v284
        %289 = vst [vmem:[#allocation2 + $0x18] sm:$0xff] %v286
        %290 = vst.msk [vmem:[#allocation2 + $0x20] sm:$0xf] %vm254, %v281
        %v291 = vld [vmem:[%s249] sm:$0xff]
        %v292 = vld [vmem:[%s249 + $0x8] sm:$0xf]
        %295 = vrot.lane.b32.xlu0 %v291, 110
        %v296 = vpop.permute.xlu0 %295
        %297 = vrot.lane.b32.xlu0 %v292, 110
        %v298 = vpop.permute.xlu0 %297
        %v299 = vrot.slane %v296, 4
        %v300 = vrot.slane %v298, 4
        %v301 = vsel %vm266, %v299, %v300
        %vm302 = vcmask 900096
        %v303 = vsel %vm302, %v296, %v301
        %306 = vst [vmem:[#allocation2 + $0x24] sm:$0xff] %v303
        %307 = vst.msk [vmem:[#allocation2 + $0x2c] sm:$0xf] %vm254, %v298
        %v308 = vld [vmem:[%s249] sm:$0xff]
        %v309 = vld [vmem:[%s249 + $0x8] sm:$0xf]
        %312 = vrot.lane.b32.xlu0 %v308, 109
        %v313 = vpop.permute.xlu0 %312
        %314 = vrot.lane.b32.xlu0 %v309, 109
        %v315 = vpop.permute.xlu0 %314
        %v316 = vrot.slane %v313, 4
        %v317 = vrot.slane %v315, 4
        %v318 = vsel %vm266, %v316, %v317
        %vm319 = vcmask 891904
        %v320 = vsel %vm319, %v313, %v318
        %323 = vst [vmem:[#allocation2 + $0x30] sm:$0xff] %v320
        %324 = vst.msk [vmem:[#allocation2 + $0x38] sm:$0xf] %vm254, %v315
        %v325 = vld [vmem:[%s249] sm:$0xff]
        %v326 = vld [vmem:[%s249 + $0x8] sm:$0xf]
        %329 = vrot.lane.b32.xlu0 %v325, 108
        %v330 = vpop.permute.xlu0 %329
        %331 = vrot.lane.b32.xlu0 %v326, 108
        %v332 = vpop.permute.xlu0 %331
        %v333 = vrot.slane %v330, 4
        %v334 = vrot.slane %v332, 4
        %v335 = vsel %vm266, %v333, %v334
        %vm336 = vcmask 883712
        %v337 = vsel %vm336, %v330, %v335
        %340 = vst [vmem:[#allocation2 + $0x3c] sm:$0xff] %v337
        %341 = vst.msk [vmem:[#allocation2 + $0x44] sm:$0xf] %vm254, %v332
        %v342 = vld [vmem:[%s249] sm:$0xff]
        %v343 = vld [vmem:[%s249 + $0x8] sm:$0xf]
        %346 = vrot.lane.b32.xlu0 %v342, 92
        %v347 = vpop.permute.xlu0 %346
        %348 = vrot.lane.b32.xlu0 %v343, 92
        %v349 = vpop.permute.xlu0 %348
        %v350 = vrot.slane %v347, 4
        %v351 = vrot.slane %v349, 4
        %v352 = vsel %vm266, %v350, %v351
        %vm353 = vcmask 752640
        %v354 = vsel %vm353, %v347, %v352
        %357 = vst [vmem:[#allocation2 + $0x48] sm:$0xff] %v354
        %358 = vst.msk [vmem:[#allocation2 + $0x50] sm:$0xf] %vm254, %v349
        %v359 = vld [vmem:[%s249] sm:$0xff]
        %v360 = vld [vmem:[%s249 + $0x8] sm:$0xf]
        %363 = vrot.lane.b32.xlu0 %v359, 91
        %v364 = vpop.permute.xlu0 %363
        %365 = vrot.lane.b32.xlu0 %v360, 91
        %v366 = vpop.permute.xlu0 %365
        %v367 = vrot.slane %v364, 4
        %v368 = vrot.slane %v366, 4
        %v369 = vsel %vm266, %v367, %v368
        %vm370 = vcmask 744448
        %v371 = vsel %vm370, %v364, %v369
        %374 = vst [vmem:[#allocation2 + $0x54] sm:$0xff] %v371
        %375 = vst.msk [vmem:[#allocation2 + $0x5c] sm:$0xf] %vm254, %v366
        %v376 = vld [vmem:[%s249] sm:$0xff]
        %v377 = vld [vmem:[%s249 + $0x8] sm:$0xf]
        %380 = vrot.lane.b32.xlu0 %v376, 90
        %v381 = vpop.permute.xlu0 %380
        %382 = vrot.lane.b32.xlu0 %v377, 90
        %v383 = vpop.permute.xlu0 %382
        %v384 = vrot.slane %v381, 4
        %v385 = vrot.slane %v383, 4
        %v386 = vsel %vm266, %v384, %v385
        %vm387 = vcmask 736256
        %v388 = vsel %vm387, %v381, %v386
        %391 = vst [vmem:[#allocation2 + $0x60] sm:$0xff] %v388
        %392 = vst.msk [vmem:[#allocation2 + $0x68] sm:$0xf] %vm254, %v383
        %v393 = vld [vmem:[%s1] sm:$0xf]
        %v394 = vld [vmem:[%s1 + $0x4] sm:$0xf]
        %v395 = vld [vmem:[%s1 + $0x8] sm:$0xf]
        %v396 = vld [vmem:[%s1 + $0xc] sm:$0xf]
        %v397 = vld [vmem:[#allocation2] sm:$0xff]
        %v398 = vld [vmem:[#allocation2 + $0x8] sm:$0xf]
        %v399 = vld [vmem:[#allocation2 + $0xc] sm:$0xff]
        %v400 = vld [vmem:[#allocation2 + $0x14] sm:$0xf]
        %v401 = vld [vmem:[#allocation2 + $0x18] sm:$0xff]
        %v402 = vld [vmem:[#allocation2 + $0x20] sm:$0xf]
        %v403 = vld [vmem:[#allocation2 + $0x24] sm:$0xff]
        %v404 = vld [vmem:[#allocation2 + $0x2c] sm:$0xf]
        %v405 = vld [vmem:[#allocation2 + $0x30] sm:$0xff]
        %v406 = vld [vmem:[#allocation2 + $0x38] sm:$0xf]
        %v407 = vld [vmem:[#allocation2 + $0x3c] sm:$0xff]
        %v408 = vld [vmem:[#allocation2 + $0x44] sm:$0xf]
        %v409 = vld [vmem:[#allocation2 + $0x48] sm:$0xff]
        %v410 = vld [vmem:[#allocation2 + $0x50] sm:$0xf]
        %v411 = vld [vmem:[#allocation2 + $0x54] sm:$0xff]
        %v412 = vld [vmem:[#allocation2 + $0x5c] sm:$0xf]
        %v413 = vld [vmem:[#allocation2 + $0x60] sm:$0xff]
        %v414 = vld [vmem:[#allocation2 + $0x68] sm:$0xf]
        %v419 = vunpack.c.l.b16 %v393
        %v420 = vunpack.c.l.b16 %v394
        %v421 = vunpack.c.l.b16 %v395
        %v422 = vunpack.c.l.b16 %v396
        %v423 = vpack.c.b16 %v420, %v419
        %v424 = vpack.c.b16 %v422, %v421
        %v443 = vunpack.c.l.b16 %v397
        %v444 = vunpack.c.h.b16 %v397
        %v445 = vunpack.c.l.b16 %v398
        %v446 = vunpack.c.l.b16 %v399
        %v447 = vunpack.c.h.b16 %v399
        %v448 = vunpack.c.l.b16 %v400
        %v449 = vunpack.c.l.b16 %v401
        %v450 = vunpack.c.h.b16 %v401
        %v451 = vunpack.c.l.b16 %v402
        %v452 = vunpack.c.l.b16 %v403
        %v453 = vunpack.c.h.b16 %v403
        %v454 = vunpack.c.l.b16 %v404
        %v455 = vunpack.c.l.b16 %v405
        %v456 = vunpack.c.h.b16 %v405
        %v457 = vunpack.c.l.b16 %v406
        %v458 = vunpack.c.l.b16 %v407
        %v459 = vunpack.c.h.b16 %v407
        %v460 = vunpack.c.l.b16 %v408
        %v461 = vunpack.c.l.b16 %v409
        %v462 = vunpack.c.h.b16 %v409
        %v463 = vunpack.c.l.b16 %v410
        %v464 = vunpack.c.l.b16 %v411
        %v465 = vunpack.c.h.b16 %v411
        %v466 = vunpack.c.l.b16 %v412
        %v467 = vunpack.c.l.b16 %v413
        %v468 = vunpack.c.h.b16 %v413
        %v469 = vunpack.c.l.b16 %v414
        %v470 = vpack.c.b16 %v446, %v443
        %v471 = vpack.c.b16 %v447, %v444
        %v472 = vpack.c.b16 %v448, %v445
        %v473 = vpack.c.b16 %v452, %v449
        %v474 = vpack.c.b16 %v453, %v450
        %v475 = vpack.c.b16 %v454, %v451
        %v476 = vpack.c.b16 %v458, %v455
        %v477 = vpack.c.b16 %v459, %v456
        %v478 = vpack.c.b16 %v460, %v457
        %v479 = vpack.c.b16 %v464, %v461
        %v480 = vpack.c.b16 %v465, %v462
        %v481 = vpack.c.b16 %v466, %v463
        %v482 = vpack.c.b16 %v467, %v467
        %v483 = vpack.c.b16 %v468, %v468
        %v484 = vpack.c.b16 %v469, %v469
        %vm497 = vcmask 588800
        %v499 = vsel %vm497, %v423, 0
        %v502 = vsel %vm497, %v424, 0
        %vm504 = vcmask 1043456
        %v506 = vsel %vm504, %v482, 0
        %v509 = vsel %vm504, %v483, 0
        %v512 = vsel %vm504, %v484, 0
        %514 = vmatpush.bf16.msra.mxu0 0
        %515 = vmatpush.bf16.msra.mxu0 0
        %516 = vmatpush.bf16.msra.mxu0 0
        %517 = vmatpush.bf16.msra.mxu0 %v506
        %518 = vmatpush.bf16.msra.mxu0 %v479
        %519 = vmatpush.bf16.msra.mxu0 %v476
        %520 = vmatpush.bf16.msra.mxu0 %v473
        %521 = vmatpush.bf16.msra.mxu0 %v470
        %522 = vmatmul.bf16.gmra.mxu0 %v499
        %v523 = vpop.f32.mrf.mxu0
        %v524 = vadd.f32 0.0, %v523
        %v525 = vpop.f32.mrf.mxu0
        %v526 = vadd.f32 0.0, %v525
        %527 = vmatmul.bf16.gmra.mxu0 %v502
        %v528 = vpop.f32.mrf.mxu0
        %v529 = vadd.f32 0.0, %v528
        %v530 = vpop.f32.mrf.mxu0
        %v531 = vadd.f32 0.0, %v530
        %532 = vdwg.mxu0
        %533 = vmatpush.bf16.msra.mxu0 0
        %534 = vmatpush.bf16.msra.mxu0 0
        %535 = vmatpush.bf16.msra.mxu0 0
        %536 = vmatpush.bf16.msra.mxu0 %v509
        %537 = vmatpush.bf16.msra.mxu0 %v480
        %538 = vmatpush.bf16.msra.mxu0 %v477
        %539 = vmatpush.bf16.msra.mxu0 %v474
        %540 = vmatpush.bf16.msra.mxu0 %v471
        %541 = vmatmul.bf16.gmra.mxu0 %v499
        %v542 = vpop.f32.mrf.mxu0
        %v543 = vadd.f32 0.0, %v542
        %v544 = vpop.f32.mrf.mxu0
        %v545 = vadd.f32 0.0, %v544
        %546 = vmatmul.bf16.gmra.mxu0 %v502
        %v547 = vpop.f32.mrf.mxu0
        %v548 = vadd.f32 0.0, %v547
        %v549 = vpop.f32.mrf.mxu0
        %v550 = vadd.f32 0.0, %v549
        %551 = vdwg.mxu0
        %552 = vmatpush.bf16.msra.mxu0 0
        %553 = vmatpush.bf16.msra.mxu0 0
        %554 = vmatpush.bf16.msra.mxu0 0
        %555 = vmatpush.bf16.msra.mxu0 %v512
        %556 = vmatpush.bf16.msra.mxu0 %v481
        %557 = vmatpush.bf16.msra.mxu0 %v478
        %558 = vmatpush.bf16.msra.mxu0 %v475
        %559 = vmatpush.bf16.msra.mxu0 %v472
        %560 = vmatmul.bf16.gmra.mxu0 %v499
        %v561 = vpop.f32.mrf.mxu0
        %v562 = vadd.f32 0.0, %v561
        %v563 = vpop.f32.mrf.mxu0
        %v564 = vadd.f32 0.0, %v563
        %565 = vmatmul.bf16.gmra.mxu0 %v502
        %v566 = vpop.f32.mrf.mxu0
        %v567 = vadd.f32 0.0, %v566
        %v568 = vpop.f32.mrf.mxu0
        %v569 = vadd.f32 0.0, %v568
        %570 = vdwg.mxu0
        %v571 = vlaneseq
        %v572 = vand.u32 %v571, 127
        %v573 = vadd.s32 %v572, 128
        %v574 = vadd.s32 %v572, 256
        %vm575 = vcmp.lt.s32.totalorder %v572, 0
        %v576 = vsub.s32 0, %v572
        %v577 = vsel %vm575, %v576, %v572
        %v578 = vand.u32 %v577, 65535
        %v579 = vshrl.u32 %v577, 16
        %v581 = vmul.u32 %v578, 14564
        %v582 = vmul.u32 %v578, 58254
        %v583 = vmul.u32 %v579, 14564
        %v584 = vmul.u32 %v579, 58254
        %v585 = vshll.u32 %v582, 16
        %v586 = vshrl.u32 %v582, 16
        %v587 = vshll.u32 %v583, 16
        %v588 = vshrl.u32 %v583, 16
        %vm589 = vc.u32 %v581, %v585
        %v590 = vsel %vm589, 1, 0
        %v591 = vadd.s32 %v581, %v585
        %v592 = vadd.s32 %v584, %v590
        %vm593 = vc.u32 %v591, %v587
        %v594 = vsel %vm593, 1, 0
        %v595 = vadd.s32 %v591, %v587
        %v596 = vadd.s32 %v592, %v594
        %v597 = vadd.s32 %v596, %v586
        %v598 = vadd.s32 %v597, %v588
        %v599 = vshrl.u32 %v598, 4
        %v600 = vmul.u32 %v599, 18
        %v601 = vsub.s32 %v577, %v600
        %v602 = vsub.s32 0, %v601
        %v603 = vsel %vm575, %v602, %v601
        %vm604 = vcmp.lt.s32.totalorder %v573, 0
        %v605 = vsub.s32 0, %v573
        %v606 = vsel %vm604, %v605, %v573
        %v607 = vand.u32 %v606, 65535
        %v608 = vshrl.u32 %v606, 16
        %v610 = vmul.u32 %v607, 14564
        %v611 = vmul.u32 %v607, 58254
        %v612 = vmul.u32 %v608, 14564
        %v613 = vmul.u32 %v608, 58254
        %v614 = vshll.u32 %v611, 16
        %v615 = vshrl.u32 %v611, 16
        %v616 = vshll.u32 %v612, 16
        %v617 = vshrl.u32 %v612, 16
        %vm618 = vc.u32 %v610, %v614
        %v619 = vsel %vm618, 1, 0
        %v620 = vadd.s32 %v610, %v614
        %v621 = vadd.s32 %v613, %v619
        %vm622 = vc.u32 %v620, %v616
        %v623 = vsel %vm622, 1, 0
        %v624 = vadd.s32 %v620, %v616
        %v625 = vadd.s32 %v621, %v623
        %v626 = vadd.s32 %v625, %v615
        %v627 = vadd.s32 %v626, %v617
        %v628 = vshrl.u32 %v627, 4
        %v629 = vmul.u32 %v628, 18
        %v630 = vsub.s32 %v606, %v629
        %v631 = vsub.s32 0, %v630
        %v632 = vsel %vm604, %v631, %v630
        %vm633 = vcmp.lt.s32.totalorder %v574, 0
        %v634 = vsub.s32 0, %v574
        %v635 = vsel %vm633, %v634, %v574
        %v636 = vand.u32 %v635, 65535
        %v637 = vshrl.u32 %v635, 16
        %v639 = vmul.u32 %v636, 14564
        %v640 = vmul.u32 %v636, 58254
        %v641 = vmul.u32 %v637, 14564
        %v642 = vmul.u32 %v637, 58254
        %v643 = vshll.u32 %v640, 16
        %v644 = vshrl.u32 %v640, 16
        %v645 = vshll.u32 %v641, 16
        %v646 = vshrl.u32 %v641, 16
        %vm647 = vc.u32 %v639, %v643
        %v648 = vsel %vm647, 1, 0
        %v649 = vadd.s32 %v639, %v643
        %v650 = vadd.s32 %v642, %v648
        %vm651 = vc.u32 %v649, %v645
        %v652 = vsel %vm651, 1, 0
        %v653 = vadd.s32 %v649, %v645
        %v654 = vadd.s32 %v650, %v652
        %v655 = vadd.s32 %v654, %v644
        %v656 = vadd.s32 %v655, %v646
        %v657 = vshrl.u32 %v656, 4
        %v658 = vmul.u32 %v657, 18
        %v659 = vsub.s32 %v635, %v658
        %v660 = vsub.s32 0, %v659
        %v661 = vsel %vm633, %v660, %v659
        %vm662 = vcmp.ne.s32.totalorder %v603, 0
        %vm663 = vcmp.ne.s32.totalorder %v632, 0
        %vm664 = vcmp.ne.s32.totalorder %v661, 0
        %vm665 = vcmp.lt.s32.totalorder %v603, 0
        %vm666 = vcmp.lt.s32.totalorder %v632, 0
        %vm667 = vcmp.lt.s32.totalorder %v661, 0
        %vm668 = vmand %vm665, %vm662
        %vm669 = vmand %vm666, %vm663
        %vm670 = vmand %vm667, %vm664
        %v671 = vadd.s32 %v603, 18
        %v672 = vadd.s32 %v632, 18
        %v673 = vadd.s32 %v661, 18
        %v674 = vsel %vm668, %v671, %v603
        %v675 = vsel %vm669, %v672, %v632
        %v676 = vsel %vm670, %v673, %v661
        %vm677 = vcmp.lt.s32.totalorder %v674, 16
        %vm678 = vcmp.lt.s32.totalorder %v675, 16
        %vm679 = vcmp.lt.s32.totalorder %v676, 16
        %v680 = vmul.f32 %v524, %v524
        %v681 = vmul.f32 %v543, %v543
        %v682 = vmul.f32 %v562, %v562
        %v683 = vmul.f32 %v526, %v526
        %v684 = vmul.f32 %v545, %v545
        %v685 = vmul.f32 %v564, %v564
        %v686 = vmul.f32 %v529, %v529
        %v687 = vmul.f32 %v548, %v548
        %v688 = vmul.f32 %v567, %v567
        %v689 = vmul.f32 %v531, %v531
        %v690 = vmul.f32 %v550, %v550
        %v691 = vmul.f32 %v569, %v569
        %v692 = vsel %vm677, 1, 0
        %v693 = vsel %vm678, 1, 0
        %v694 = vsel %vm679, 1, 0
        %vm695 = vcmp.eq.s32.totalorder %v692, 1
        %vm696 = vcmp.eq.s32.totalorder %v693, 1
        %vm697 = vcmp.eq.s32.totalorder %v694, 1
        %v698 = vsel %vm695, %v524, 0.0
        %v699 = vsel %vm696, %v543, 0.0
        %v700 = vsel %vm697, %v562, 0.0
        %v701 = vsel %vm695, %v526, 0.0
        %v702 = vsel %vm696, %v545, 0.0
        %v703 = vsel %vm697, %v564, 0.0
        %v704 = vsel %vm695, %v529, 0.0
        %v705 = vsel %vm696, %v548, 0.0
        %v706 = vsel %vm697, %v567, 0.0
        %v707 = vsel %vm695, %v531, 0.0
        %v708 = vsel %vm696, %v550, 0.0
        %v709 = vsel %vm697, %v569, 0.0
        %v710 = vsel %vm695, %v680, 0.0
        %v711 = vsel %vm696, %v681, 0.0
        %v712 = vsel %vm697, %v682, 0.0
        %v713 = vsel %vm695, %v683, 0.0
        %v714 = vsel %vm696, %v684, 0.0
        %v715 = vsel %vm697, %v685, 0.0
        %v716 = vsel %vm695, %v686, 0.0
        %v717 = vsel %vm696, %v687, 0.0
        %v718 = vsel %vm697, %v688, 0.0
        %v719 = vsel %vm695, %v689, 0.0
        %v720 = vsel %vm696, %v690, 0.0
        %v721 = vsel %vm697, %v691, 0.0
        %v722 = vadd.f32 %v698, %v699
        %vm723 = vcmask 261120
        %v724 = vsel %vm723, %v700, 0.0
        %v725 = vadd.f32 %v722, %v724
        %726 = vadd.xlane.f32.xlu0 %v725
        %v727 = vpop.xlane.xlu0 %726
        %v728 = vadd.f32 %v701, %v702
        %v729 = vsel %vm723, %v703, 0.0
        %v730 = vadd.f32 %v728, %v729
        %731 = vadd.xlane.f32.xlu0 %v730
        %v732 = vpop.xlane.xlu0 %731
        %v733 = vadd.f32 %v704, %v705
        %v734 = vsel %vm723, %v706, 0.0
        %v735 = vadd.f32 %v733, %v734
        %736 = vadd.xlane.f32.xlu0 %v735
        %v737 = vpop.xlane.xlu0 %736
        %v738 = vadd.f32 %v707, %v708
        %v739 = vsel %vm723, %v709, 0.0
        %v740 = vadd.f32 %v738, %v739
        %741 = vadd.xlane.f32.xlu0 %v740
        %v742 = vpop.xlane.xlu0 %741
        %v743 = vadd.f32 %v710, %v711
        %v744 = vsel %vm723, %v712, 0.0
        %v745 = vadd.f32 %v743, %v744
        %746 = vadd.xlane.f32.xlu0 %v745
        %v747 = vpop.xlane.xlu0 %746
        %v748 = vadd.f32 %v713, %v714
        %v749 = vsel %vm723, %v715, 0.0
        %v750 = vadd.f32 %v748, %v749
        %751 = vadd.xlane.f32.xlu0 %v750
        %v752 = vpop.xlane.xlu0 %751
        %v753 = vadd.f32 %v716, %v717
        %v754 = vsel %vm723, %v718, 0.0
        %v755 = vadd.f32 %v753, %v754
        %756 = vadd.xlane.f32.xlu0 %v755
        %v757 = vpop.xlane.xlu0 %756
        %v758 = vadd.f32 %v719, %v720
        %v759 = vsel %vm723, %v721, 0.0
        %v760 = vadd.f32 %v758, %v759
        %761 = vadd.xlane.f32.xlu0 %v760
        %v762 = vpop.xlane.xlu0 %761
        %v763 = vld [vmem:[%s2] sm:$0xff]
        %v764 = vld [vmem:[%s2 + $0x8] sm:$0xff]
        %v765 = vld [vmem:[%s2 + $0x10] sm:$0xff]
        %v766 = vld [vmem:[%s2 + $0x18] sm:$0xff]
        %v767 = vmul.f32 %v763, 256.0
        %v768 = vmul.f32 %v764, 256.0
        %v769 = vmul.f32 %v765, 256.0
        %v770 = vmul.f32 %v766, 256.0
        %v771 = vadd.f32 %v727, %v767
        %v772 = vadd.f32 %v732, %v768
        %v773 = vadd.f32 %v737, %v769
        %v774 = vadd.f32 %v742, %v770
        %v775 = vmul.f32 %v763, 2.0
        %v776 = vmul.f32 %v764, 2.0
        %v777 = vmul.f32 %v765, 2.0
        %v778 = vmul.f32 %v766, 2.0
        %v779 = vmul.f32 %v775, %v727
        %v780 = vmul.f32 %v776, %v732
        %v781 = vmul.f32 %v777, %v737
        %v782 = vmul.f32 %v778, %v742
        %v783 = vadd.f32 %v747, %v779
        %v784 = vadd.f32 %v752, %v780
        %v785 = vadd.f32 %v757, %v781
        %v786 = vadd.f32 %v762, %v782
        %v787 = vmul.f32 %v767, %v763
        %v788 = vmul.f32 %v768, %v764
        %v789 = vmul.f32 %v769, %v765
        %v790 = vmul.f32 %v770, %v766
        %v791 = vadd.f32 %v783, %v787
        %v792 = vadd.f32 %v784, %v788
        %v793 = vadd.f32 %v785, %v789
        %v794 = vadd.f32 %v786, %v790
        %v795 = vld [vmem:[%s5] sm:$0xff]
        %v796 = vld [vmem:[%s5 + $0x8] sm:$0xff]
        %v797 = vld [vmem:[%s5 + $0x10] sm:$0xff]
        %v798 = vld [vmem:[%s5 + $0x18] sm:$0xff]
        %v800 = vsel %vm723, %v795, 0
        %v803 = vsel %vm723, %v796, 0
        %v806 = vsel %vm723, %v797, 0
        %v809 = vsel %vm723, %v798, 0
        %811 = vmatpush.msra.mxu0 0.0
        %812 = vmatpush.msra.mxu0 0.0
        %813 = vmatpush.msra.mxu0 0.0
        %814 = vmatpush.msra.mxu0 0.0
        %815 = vmatpush.msra.mxu0 0.0
        %816 = vmatpush.msra.mxu0 0.0
        %817 = vmatpush.msra.mxu0 0.0
        %818 = vmatpush.msra.mxu0 0.0
        %819 = vmatpush.msra.mxu0 0.0
        %820 = vmatpush.msra.mxu0 0.0
        %821 = vmatpush.msra.mxu0 0.0
        %822 = vmatpush.msra.mxu0 0.0
        %823 = vmatpush.msra.mxu0 %v774
        %824 = vmatpush.msra.mxu0 %v773
        %825 = vmatpush.msra.mxu0 %v772
        %826 = vmatpush.msra.mxu0 %v771
        %827 = vmatmul.f32.gmra.mxu0 %v800
        %v828 = vpop.f32.mrf.mxu0
        %v829 = vadd.f32 0.0, %v828
        %830 = vmatmul.f32.gmra.mxu0 %v803
        %v831 = vpop.f32.mrf.mxu0
        %v832 = vadd.f32 0.0, %v831
        %833 = vmatmul.f32.gmra.mxu0 %v806
        %v834 = vpop.f32.mrf.mxu0
        %v835 = vadd.f32 0.0, %v834
        %836 = vmatmul.f32.gmra.mxu0 %v809
        %v837 = vpop.f32.mrf.mxu0
        %v838 = vadd.f32 0.0, %v837
        %839 = vdwg.mxu0
        %840 = vmatpush.msra.mxu0 0.0
        %841 = vmatpush.msra.mxu0 0.0
        %842 = vmatpush.msra.mxu0 0.0
        %843 = vmatpush.msra.mxu0 0.0
        %844 = vmatpush.msra.mxu0 0.0
        %845 = vmatpush.msra.mxu0 0.0
        %846 = vmatpush.msra.mxu0 0.0
        %847 = vmatpush.msra.mxu0 0.0
        %848 = vmatpush.msra.mxu0 0.0
        %849 = vmatpush.msra.mxu0 0.0
        %850 = vmatpush.msra.mxu0 0.0
        %851 = vmatpush.msra.mxu0 0.0
        %852 = vmatpush.msra.mxu0 %v794
        %853 = vmatpush.msra.mxu0 %v793
        %854 = vmatpush.msra.mxu0 %v792
        %855 = vmatpush.msra.mxu0 %v791
        %856 = vmatmul.f32.gmra.mxu0 %v800
        %v857 = vpop.f32.mrf.mxu0
        %v858 = vadd.f32 0.0, %v857
        %859 = vmatmul.f32.gmra.mxu0 %v803
        %v860 = vpop.f32.mrf.mxu0
        %v861 = vadd.f32 0.0, %v860
        %862 = vmatmul.f32.gmra.mxu0 %v806
        %v863 = vpop.f32.mrf.mxu0
        %v864 = vadd.f32 0.0, %v863
        %865 = vmatmul.f32.gmra.mxu0 %v809
        %v866 = vpop.f32.mrf.mxu0
        %v867 = vadd.f32 0.0, %v866
        %868 = vdwg.mxu0
        %v869 = vmul.f32 %v829, %v829
        %v870 = vmul.f32 %v832, %v832
        %v871 = vmul.f32 %v835, %v835
        %v872 = vmul.f32 %v838, %v838
        %v873 = vsub.f32 %v858, %v869
        %v874 = vsub.f32 %v861, %v870
        %v875 = vsub.f32 %v864, %v871
        %v876 = vsub.f32 %v867, %v872
        %v877 = vmax.f32 %v873, 0.0
        %v878 = vmax.f32 %v874, 0.0
        %v879 = vmax.f32 %v875, 0.0
        %v880 = vmax.f32 %v876, 0.0
        %v881 = vadd.f32 %v877, 1e-05
        %v882 = vadd.f32 %v878, 1e-05
        %v883 = vadd.f32 %v879, 1e-05
        %v884 = vadd.f32 %v880, 1e-05
        %v885 = vrsqrt.pop %v881
        %v886 = vmul.f32 %v885, %v881
        %v887 = vmul.f32 %v886, %v885
        %v888 = vmul.f32 0.5, %v887
        %v889 = vsub.f32 1.5, %v888
        %v890 = vmul.f32 %v885, %v889
        %vm891 = vweird.f32 %v881
        %vm892 = vweird.f32 %v885
        %vm893 = vmor %vm891, %vm892
        %v894 = vsel %vm893, %v885, %v890
        %v895 = vrsqrt.pop %v882
        %v896 = vmul.f32 %v895, %v882
        %v897 = vmul.f32 %v896, %v895
        %v898 = vmul.f32 0.5, %v897
        %v899 = vsub.f32 1.5, %v898
        %v900 = vmul.f32 %v895, %v899
        %vm901 = vweird.f32 %v882
        %vm902 = vweird.f32 %v895
        %vm903 = vmor %vm901, %vm902
        %v904 = vsel %vm903, %v895, %v900
        %v905 = vrsqrt.pop %v883
        %v906 = vmul.f32 %v905, %v883
        %v907 = vmul.f32 %v906, %v905
        %v908 = vmul.f32 0.5, %v907
        %v909 = vsub.f32 1.5, %v908
        %v910 = vmul.f32 %v905, %v909
        %vm911 = vweird.f32 %v883
        %vm912 = vweird.f32 %v905
        %vm913 = vmor %vm911, %vm912
        %v914 = vsel %vm913, %v905, %v910
        %v915 = vrsqrt.pop %v884
        %v916 = vmul.f32 %v915, %v884
        %v917 = vmul.f32 %v916, %v915
        %v918 = vmul.f32 0.5, %v917
        %v919 = vsub.f32 1.5, %v918
        %v920 = vmul.f32 %v915, %v919
        %vm921 = vweird.f32 %v884
        %vm922 = vweird.f32 %v915
        %vm923 = vmor %vm921, %vm922
        %v924 = vsel %vm923, %v915, %v920
        %v925 = vld [vmem:[%s3] sm:$0xff]
        %v926 = vld [vmem:[%s3 + $0x8] sm:$0xff]
        %v927 = vld [vmem:[%s3 + $0x10] sm:$0xff]
        %v928 = vld [vmem:[%s3 + $0x18] sm:$0xff]
        %v929 = vmul.f32 %v894, %v925
        %v930 = vmul.f32 %v904, %v926
        %v931 = vmul.f32 %v914, %v927
        %v932 = vmul.f32 %v924, %v928
        %v933 = vsub.f32 %v763, %v829
        %v934 = vsub.f32 %v764, %v832
        %v935 = vsub.f32 %v765, %v835
        %v936 = vsub.f32 %v766, %v838
        %v937 = vmul.f32 %v933, %v929
        %v938 = vmul.f32 %v934, %v930
        %v939 = vmul.f32 %v935, %v931
        %v940 = vmul.f32 %v936, %v932
        %v941 = vld [vmem:[%s4] sm:$0xff]
        %v942 = vld [vmem:[%s4 + $0x8] sm:$0xff]
        %v943 = vld [vmem:[%s4 + $0x10] sm:$0xff]
        %v944 = vld [vmem:[%s4 + $0x18] sm:$0xff]
        %v945 = vadd.f32 %v937, %v941
        %v946 = vadd.f32 %v938, %v942
        %v947 = vadd.f32 %v939, %v943
        %v948 = vadd.f32 %v940, %v944
        %950 = vset.pattern.permute.xlu0 0
        %951 = vperm.xlu0 %950, %v929
        %v952 = vpop.permute.xlu0 %951
        %955 = vset.pattern.permute.xlu0 0
        %956 = vperm.xlu0 %955, %v930
        %v957 = vpop.permute.xlu0 %956
        %960 = vset.pattern.permute.xlu0 0
        %961 = vperm.xlu0 %960, %v931
        %v962 = vpop.permute.xlu0 %961
        %965 = vset.pattern.permute.xlu0 0
        %966 = vperm.xlu0 %965, %v932
        %v967 = vpop.permute.xlu0 %966
        %v969 = vmul.f32 %v524, %v952
        %v970 = vmul.f32 %v543, %v952
        %v971 = vmul.f32 %v562, %v952
        %v972 = vmul.f32 %v526, %v957
        %v973 = vmul.f32 %v545, %v957
        %v974 = vmul.f32 %v564, %v957
        %v975 = vmul.f32 %v529, %v962
        %v976 = vmul.f32 %v548, %v962
        %v977 = vmul.f32 %v567, %v962
        %v978 = vmul.f32 %v531, %v967
        %v979 = vmul.f32 %v550, %v967
        %v980 = vmul.f32 %v569, %v967
        %982 = vset.pattern.permute.xlu0 0
        %983 = vperm.xlu0 %982, %v945
        %v984 = vpop.permute.xlu0 %983
        %987 = vset.pattern.permute.xlu0 0
        %988 = vperm.xlu0 %987, %v946
        %v989 = vpop.permute.xlu0 %988
        %992 = vset.pattern.permute.xlu0 0
        %993 = vperm.xlu0 %992, %v947
        %v994 = vpop.permute.xlu0 %993
        %997 = vset.pattern.permute.xlu0 0
        %998 = vperm.xlu0 %997, %v948
        %v999 = vpop.permute.xlu0 %998
        %v1001 = vadd.f32 %v969, %v984
        %v1002 = vadd.f32 %v970, %v984
        %v1003 = vadd.f32 %v971, %v984
        %v1004 = vadd.f32 %v972, %v989
        %v1005 = vadd.f32 %v973, %v989
        %v1006 = vadd.f32 %v974, %v989
        %v1007 = vadd.f32 %v975, %v994
        %v1008 = vadd.f32 %v976, %v994
        %v1009 = vadd.f32 %v977, %v994
        %v1010 = vadd.f32 %v978, %v999
        %v1011 = vadd.f32 %v979, %v999
        %v1012 = vadd.f32 %v980, %v999
        %v1013 = vmax.f32 %v1001, 0.0
        %v1014 = vmax.f32 %v1002, 0.0
        %v1015 = vmax.f32 %v1003, 0.0
        %v1016 = vmax.f32 %v1004, 0.0
        %v1017 = vmax.f32 %v1005, 0.0
        %v1018 = vmax.f32 %v1006, 0.0
        %v1019 = vmax.f32 %v1007, 0.0
        %v1020 = vmax.f32 %v1008, 0.0
        %v1021 = vmax.f32 %v1009, 0.0
        %v1022 = vmax.f32 %v1010, 0.0
        %v1023 = vmax.f32 %v1011, 0.0
        %v1024 = vmax.f32 %v1012, 0.0
        %v1025 = vsel %vm695, %v1013, 0.0
        %v1026 = vsel %vm696, %v1014, 0.0
        %v1027 = vsel %vm697, %v1015, 0.0
        %v1028 = vsel %vm695, %v1016, 0.0
        %v1029 = vsel %vm696, %v1017, 0.0
        %v1030 = vsel %vm697, %v1018, 0.0
        %v1031 = vsel %vm695, %v1019, 0.0
        %v1032 = vsel %vm696, %v1020, 0.0
        %v1033 = vsel %vm697, %v1021, 0.0
        %v1034 = vsel %vm695, %v1022, 0.0
        %v1035 = vsel %vm696, %v1023, 0.0
        %v1036 = vsel %vm697, %v1024, 0.0
        %1037 = vst [vmem:[%s244] sm:$0xff] %v1025
        %1038 = vst [vmem:[%s244 + $0x8] sm:$0xff] %v1026
        %1039 = vst.msk [vmem:[%s244 + $0x10] sm:$0xff] %vm723, %v1027
        %1040 = vst [vmem:[%s244 + $0x18] sm:$0xff] %v1028
        %1041 = vst [vmem:[%s244 + $0x20] sm:$0xff] %v1029
        %1042 = vst.msk [vmem:[%s244 + $0x28] sm:$0xff] %vm723, %v1030
        %1043 = vst [vmem:[%s244 + $0x30] sm:$0xff] %v1031
        %1044 = vst [vmem:[%s244 + $0x38] sm:$0xff] %v1032
        %1045 = vst.msk [vmem:[%s244 + $0x40] sm:$0xff] %vm723, %v1033
        %1046 = vst [vmem:[%s244 + $0x48] sm:$0xff] %v1034
        %1047 = vst [vmem:[%s244 + $0x50] sm:$0xff] %v1035
        %1048 = vst.msk [vmem:[%s244 + $0x58] sm:$0xff] %vm723, %v1036
        %s1049 = sand.u32 %s159, 1
        %s1050 = scalar_lea.sflag [#allocation4], %s1049
        %s1051 = sand.u32 %s159, 1
        %s1052 = smul.addr %s1051, 96
        %s1053 = scalar_lea.vmem [#allocation3], %s1052
        // Predicated region
        $region45: #{tpu_custom_call.1} parent=43 // pred_check
          %p1054 = pneg %p169
        $region46: #{tpu_custom_call.1} parent=43 // pred_check_branch
          %1056 = sbr.rel (%p1054) target = $region48
        $region47: #{tpu_custom_call.1} parent=43 // pred_region
          %1058 = vsyncadd %s1050, 0
          %s1059 = smul.addr %s20, 12
          %s1060 = smul.addr %s1059, 8
          %s1061 = scalar_lea.hbm %s6, %s1060
          %s1062 = sshll.u32 %s1053, 4
          %s1063 = int_to_ptr.vmem [resolvable:$true] %s1062
          %s1064 = sshll.u32 %s1061, 4
          %s1065 = int_to_ptr.hbm [resolvable:$true] %s1064
          %1070 = dma.vmem_to_hbm [thread:$0]  %s1063, 1536, %s1065, %s1050, 384, 384, 24
        $region48: #{tpu_custom_call.1} parent=43 // pred_fallthru
          _
      $region44: #{tpu_custom_call.1} parent=5 // pred_fallthru
        _
      %p1071 = scmp.le.s32.totalorder 2, %s15
      // Predicated region
      $region49: #{tpu_custom_call.1} parent=5 // pred_check
        %p1072 = pneg %p1071
      $region50: #{tpu_custom_call.1} parent=5 // pred_check_branch
        %1074 = sbr.rel (%p1072) target = $region52
      $region51: #{tpu_custom_call.1} parent=5 // pred_region
        %s1075 = ssub.s32 %s15, 2
        // Predicated region
        $region53: #{tpu_custom_call.1} parent=51 // pred_check
          %p1076 = pneg %p175
        $region54: #{tpu_custom_call.1} parent=51 // pred_check_branch
          %1078 = sbr.rel (%p1076) target = $region56
        $region55: #{tpu_custom_call.1} parent=51 // pred_region
          %s1079 = sand.u32 %s160, 1
          %s1080 = scalar_lea.sflag [#allocation4], %s1079
          %s1081 = sand.u32 %s160, 1
          %s1082 = smul.addr %s1081, 96
          %s1083 = scalar_lea.vmem [#allocation3], %s1082
          %1085 = dma.done %s1080, 1536
        $region56: #{tpu_custom_call.1} parent=51 // pred_fallthru
          _
      $region52: #{tpu_custom_call.1} parent=5 // pred_fallthru
        _
    $region6: #{tpu_custom_call.1} parent=1 // loop_footer
      %s19 = sadd.s32 1, %s15
    $region7: #{tpu_custom_call.1} parent=1 // loop_footer_branch
      %14 = sbr.rel target = $region3
    $region8: #{tpu_custom_call.1} parent=1 // loop_exit
      _
    %1086 = vsyncpa [#allocation4], 1
    %s1087 = scalar_lea.sflag [#allocation4], 1
    %1088 = vsyncpa %s1087, 1

</llo_original>
